<compile_context>
chip_gen: v6e
topology: v6e:2x2x1
jax: 0.10.0
libtpu: 0.0.40
codegen_flags: <defaults>
</compile_context>

<pallas_src>
import jax
import jax.numpy as jnp
from jax.experimental import pallas as pl
from jax.experimental.pallas import tpu as pltpu


def _mask_kernel(mask_ref, re_ref, im_ref, real_ref, imag_ref):
    """One (batch, time-tile) block.

    mask_ref: (5, F, Tt); re_ref / im_ref / real_ref / imag_ref: (F, Tt).
    """
    re = re_ref[...]
    im = im_ref[...]

    # |spec| and the unit phasor (cos(pha), sin(pha)) without arctan2:
    #   cos(pha) = re/|spec|, sin(pha) = im/|spec|
    # torch.angle(0+0j) == 0  ->  fall back to cos=1, sin=0 when |spec|==0.
    sq = re * re + im * im
    safe = sq > 0.0
    inv_mag = jax.lax.rsqrt(jnp.where(safe, sq, 1.0))
    mag = sq * inv_mag                          # == sqrt(sq); exactly 0 when sq == 0
    cos_pha = jnp.where(safe, re * inv_mag, 1.0)
    sin_pha = jnp.where(safe, im * inv_mag, 0.0)

    # Unfold(kernel=(3,1), padding=(1,0)) == frequency-shifted copies of mag
    # (f-1, f, f+1) with zero boundaries. XLU roll + one select per shift
    # (no concatenated temporaries).
    nf = mag.shape[0]
    row = jax.lax.broadcasted_iota(jnp.int32, mag.shape, 0)
    mag_m1 = jnp.where(row == 0, 0.0, pltpu.roll(mag, 1, axis=0))           # mag[f-1]
    mag_p1 = jnp.where(row == nf - 1, 0.0, pltpu.roll(mag, nf - 1, axis=0))  # mag[f+1]

    m0 = mask_ref[0]
    m1 = mask_ref[1]
    m2 = mask_ref[2]
    m_mag = mask_ref[3]
    m_pha = mask_ref[4]

    x = mag_m1 * m0 + mag * m1 + mag_p1 * m2
    xm = x * m_mag

    # cos/sin only on the phase-mask channel; rotate by the angle sum:
    #   cos(pha+phi) = cos_pha*cos(phi) - sin_pha*sin(phi)
    #   sin(pha+phi) = cos_pha*sin(phi) + sin_pha*cos(phi)
    cphi = jnp.cos(m_pha)
    sphi = jnp.sin(m_pha)
    real_ref[...] = xm * (cos_pha * cphi - sin_pha * sphi)
    imag_ref[...] = xm * (cos_pha * sphi + sin_pha * cphi)


def _pick_t_tile(F, T, dtype_bytes=4, vmem_budget=12 * 1024 * 1024):
    """Largest lane-dense (multiple-of-128) time tile fitting a conservative
    VMEM budget (sized for v7x's 64 MiB / 32 MiB scoped VMEM; could be raised
    on v5e/v6e). Falls back to a single full-T block when T % 128 != 0."""
    if T % 128 != 0:
        return T
    # Live, double-buffered planes per grid step: 5 mask + 2 spec + 2 out = 9.
    per_col = 2 * 9 * F * dtype_bytes
    for cand in (2048, 1024, 512, 256, 128):
        if T % cand == 0 and per_col * cand <= vmem_budget:
            return cand
    return 128


def mask_forward_planes(mask, spec_re, spec_im, *, t_tile=None):
    """mask: [B,5,F,T]; spec_re/spec_im: [B,F,T] -> (real, imag) each [B,F,T].

    Preferred API when downstream (e.g. iSTFT) can consume separate planes:
    avoids the extra HBM pass of packing [B,F,T,2]."""
    B, C, F, T = mask.shape
    assert C == 5, "Mask expects 5 mask channels"
    if t_tile is None:
        t_tile = _pick_t_tile(F, T, spec_re.dtype.itemsize)
    assert T % t_tile == 0, (T, t_tile)
    n_t = T // t_tile

    kernel = pl.pallas_call(
        _mask_kernel,
        out_shape=(
            jax.ShapeDtypeStruct((B, F, T), spec_re.dtype),
            jax.ShapeDtypeStruct((B, F, T), spec_re.dtype),
        ),
        grid_spec=pltpu.PrefetchScalarGridSpec(
            num_scalar_prefetch=0,
            grid=(B, n_t),
            in_specs=[
                pl.BlockSpec((None, 5, F, t_tile), lambda b, t: (b, 0, 0, t)),
                pl.BlockSpec((None, F, t_tile), lambda b, t: (b, 0, t)),
                pl.BlockSpec((None, F, t_tile), lambda b, t: (b, 0, t)),
            ],
            out_specs=[
                pl.BlockSpec((None, F, t_tile), lambda b, t: (b, 0, t)),
                pl.BlockSpec((None, F, t_tile), lambda b, t: (b, 0, t)),
            ],
        ),
        compiler_params=pltpu.CompilerParams(
            dimension_semantics=("parallel", "parallel"),
            vmem_limit_bytes=32 * 1024 * 1024,
        ),
        cost_estimate=pl.CostEstimate(
            flops=22 * B * F * T,
            transcendentals=3 * B * F * T,
            bytes_accessed=(5 + 2 + 2) * 4 * B * F * T,
        ),
    )
    return kernel(mask, spec_re, spec_im)


def mask_forward(mask, spec_re, spec_im, *, t_tile=None):
    """Drop-in equivalent of the torch module: returns [B, F, T, 2]."""
    real, imag = mask_forward_planes(mask, spec_re, spec_im, t_tile=t_tile)
    # TODO(synk): move this interleave into the kernel (single (B,F,2T) output
    # + free wrapper reshape) once the lane-merge reshape lowers in Mosaic.
    return jnp.stack([real, imag], axis=-1)


def mask_forward_ref(mask, spec_re, spec_im):
    """Pure-JAX reference mirroring the torch forward (uses arctan2)."""
    B, _, F, T = mask.shape
    mag = jnp.sqrt(spec_re * spec_re + spec_im * spec_im)
    pha = jnp.arctan2(spec_im, spec_re)
    mag_pad = jnp.pad(mag, ((0, 0), (1, 1), (0, 0)))
    mag_unfold = jnp.stack(
        [mag_pad[:, 0:F], mag_pad[:, 1:F + 1], mag_pad[:, 2:F + 2]], axis=1)
    x = jnp.sum(mag_unfold * mask[:, :3], axis=1)
    real = x * mask[:, 3] * jnp.cos(pha + mask[:, 4])
    imag = x * mask[:, 3] * jnp.sin(pha + mask[:, 4])
    return jnp.stack([real, imag], axis=-1)


if __name__ == "__main__":
    base_key = jax.random.PRNGKey(0)
    case_keys = jax.random.split(base_key, 2)

    def run_case(key, B, F, T, t_tile=None):
        k_mask, k_re, k_im = jax.random.split(key, 3)
        mask = jax.random.normal(k_mask, (B, 5, F, T), dtype=jnp.float32)
        spec_re = jax.random.normal(k_re, (B, F, T), dtype=jnp.float32)
        spec_im = jax.random.normal(k_im, (B, F, T), dtype=jnp.float32)

        out = jax.block_until_ready(
            mask_forward(mask, spec_re, spec_im, t_tile=t_tile))
        ref = jax.block_until_ready(mask_forward_ref(mask, spec_re, spec_im))

        assert out.shape == (B, F, T, 2), out.shape
        err = float(jnp.max(jnp.abs(out - ref)))
        assert err < 1e-4, err

    # Lane-dense, multi-tile grid: grid = (2 batches, 2 time tiles of 128).
    run_case(case_keys[0], B=2, F=16, T=256, t_tile=128)
    # T not a multiple of 128 -> single full-T block per batch (general path).
    run_case(case_keys[1], B=2, F=16, T=80)

    print("KERNEL_OK")
</pallas_src>

<mosaic_0001>
module attributes {stable_mosaic.version = 11 : i64} {
  func.func @_mask_kernel(%arg0: i32, %arg1: i32, %arg2: memref<1x5x16x128xf32, #tpu.memory_space<vmem>>, %arg3: memref<1x16x128xf32, #tpu.memory_space<vmem>>, %arg4: memref<1x16x128xf32, #tpu.memory_space<vmem>>, %arg5: memref<1x16x128xf32, #tpu.memory_space<vmem>>, %arg6: memref<1x16x128xf32, #tpu.memory_space<vmem>>) attributes {dimension_semantics = [#tpu.dimension_semantics<parallel>, #tpu.dimension_semantics<parallel>], iteration_bounds = array<i64: 2, 2>, scalar_prefetch = 0 : i64, scratch_operands = 0 : i64, tpu.core_type = #tpu.core_type<tc>, window_params = [{transform_indices = @transform_0, window_bounds = array<i64: 1, 5, 16, 128>}, {transform_indices = @transform_1, window_bounds = array<i64: 1, 16, 128>}, {transform_indices = @transform_2, window_bounds = array<i64: 1, 16, 128>}, {transform_indices = @transform_3, window_bounds = array<i64: 1, 16, 128>}, {transform_indices = @transform_4, window_bounds = array<i64: 1, 16, 128>}]} {
    %c0 = arith.constant 0 : index
    %c0_0 = arith.constant 0 : index
    %c0_1 = arith.constant 0 : index
    %0 = vector.load %arg3[%c0, %c0_0, %c0_1] : memref<1x16x128xf32, #tpu.memory_space<vmem>>, vector<1x16x128xf32>
    %1 = vector.shape_cast %0 : vector<1x16x128xf32> to vector<16x128xf32>
    %c0_2 = arith.constant 0 : index
    %c0_3 = arith.constant 0 : index
    %c0_4 = arith.constant 0 : index
    %2 = vector.load %arg4[%c0_2, %c0_3, %c0_4] : memref<1x16x128xf32, #tpu.memory_space<vmem>>, vector<1x16x128xf32>
    %3 = vector.shape_cast %2 : vector<1x16x128xf32> to vector<16x128xf32>
    %4 = arith.mulf %1, %1 : vector<16x128xf32>
    %5 = arith.mulf %3, %3 : vector<16x128xf32>
    %6 = arith.addf %4, %5 : vector<16x128xf32>
    %cst = arith.constant 0.000000e+00 : f32
    %7 = vector.broadcast %cst : f32 to vector<16x128xf32>
    %8 = arith.cmpf ogt, %6, %7 : vector<16x128xf32>
    %cst_5 = arith.constant 1.000000e+00 : f32
    %9 = vector.broadcast %cst_5 : f32 to vector<16x128xf32>
    %10 = arith.select %8, %6, %9 : vector<16x128xi1>, vector<16x128xf32>
    %11 = math.rsqrt %10 : vector<16x128xf32>
    %12 = arith.mulf %6, %11 : vector<16x128xf32>
    %13 = arith.mulf %1, %11 : vector<16x128xf32>
    %cst_6 = arith.constant 1.000000e+00 : f32
    %14 = vector.broadcast %cst_6 : f32 to vector<16x128xf32>
    %15 = arith.select %8, %13, %14 : vector<16x128xi1>, vector<16x128xf32>
    %16 = arith.mulf %3, %11 : vector<16x128xf32>
    %cst_7 = arith.constant 0.000000e+00 : f32
    %17 = vector.broadcast %cst_7 : f32 to vector<16x128xf32>
    %18 = arith.select %8, %16, %17 : vector<16x128xi1>, vector<16x128xf32>
    %19 = tpu.iota {dimensions = array<i32: 0>} : vector<16x128xi32>
    %c0_i32 = arith.constant 0 : i32
    %20 = vector.broadcast %c0_i32 : i32 to vector<16x128xi32>
    %21 = arith.cmpi eq, %19, %20 : vector<16x128xi32>
    %c1_i32 = arith.constant 1 : i32
    %22 = tpu.dynamic_rotate %12 by %c1_i32 dim 0 : vector<16x128xf32>, i32 -> vector<16x128xf32>
    %cst_8 = arith.constant 0.000000e+00 : f32
    %23 = vector.broadcast %cst_8 : f32 to vector<16x128xf32>
    %24 = arith.select %21, %23, %22 : vector<16x128xi1>, vector<16x128xf32>
    %c15_i32 = arith.constant 15 : i32
    %25 = vector.broadcast %c15_i32 : i32 to vector<16x128xi32>
    %26 = arith.cmpi eq, %19, %25 : vector<16x128xi32>
    %c15_i32_9 = arith.constant 15 : i32
    %27 = tpu.dynamic_rotate %12 by %c15_i32_9 dim 0 : vector<16x128xf32>, i32 -> vector<16x128xf32>
    %cst_10 = arith.constant 0.000000e+00 : f32
    %28 = vector.broadcast %cst_10 : f32 to vector<16x128xf32>
    %29 = arith.select %26, %28, %27 : vector<16x128xi1>, vector<16x128xf32>
    %c0_11 = arith.constant 0 : index
    %c0_12 = arith.constant 0 : index
    %c0_13 = arith.constant 0 : index
    %c0_14 = arith.constant 0 : index
    %30 = vector.load %arg2[%c0_11, %c0_12, %c0_13, %c0_14] : memref<1x5x16x128xf32, #tpu.memory_space<vmem>>, vector<1x1x16x128xf32>
    %31 = vector.shape_cast %30 : vector<1x1x16x128xf32> to vector<16x128xf32>
    %c0_15 = arith.constant 0 : index
    %c1 = arith.constant 1 : index
    %c0_16 = arith.constant 0 : index
    %c0_17 = arith.constant 0 : index
    %32 = vector.load %arg2[%c0_15, %c1, %c0_16, %c0_17] : memref<1x5x16x128xf32, #tpu.memory_space<vmem>>, vector<1x1x16x128xf32>
    %33 = vector.shape_cast %32 : vector<1x1x16x128xf32> to vector<16x128xf32>
    %c0_18 = arith.constant 0 : index
    %c2 = arith.constant 2 : index
    %c0_19 = arith.constant 0 : index
    %c0_20 = arith.constant 0 : index
    %34 = vector.load %arg2[%c0_18, %c2, %c0_19, %c0_20] : memref<1x5x16x128xf32, #tpu.memory_space<vmem>>, vector<1x1x16x128xf32>
    %35 = vector.shape_cast %34 : vector<1x1x16x128xf32> to vector<16x128xf32>
    %c0_21 = arith.constant 0 : index
    %c3 = arith.constant 3 : index
    %c0_22 = arith.constant 0 : index
    %c0_23 = arith.constant 0 : index
    %36 = vector.load %arg2[%c0_21, %c3, %c0_22, %c0_23] : memref<1x5x16x128xf32, #tpu.memory_space<vmem>>, vector<1x1x16x128xf32>
    %37 = vector.shape_cast %36 : vector<1x1x16x128xf32> to vector<16x128xf32>
    %c0_24 = arith.constant 0 : index
    %c4 = arith.constant 4 : index
    %c0_25 = arith.constant 0 : index
    %c0_26 = arith.constant 0 : index
    %38 = vector.load %arg2[%c0_24, %c4, %c0_25, %c0_26] : memref<1x5x16x128xf32, #tpu.memory_space<vmem>>, vector<1x1x16x128xf32>
    %39 = vector.shape_cast %38 : vector<1x1x16x128xf32> to vector<16x128xf32>
    %40 = arith.mulf %24, %31 : vector<16x128xf32>
    %41 = arith.mulf %12, %33 : vector<16x128xf32>
    %42 = arith.addf %40, %41 : vector<16x128xf32>
    %43 = arith.mulf %29, %35 : vector<16x128xf32>
    %44 = arith.addf %42, %43 : vector<16x128xf32>
    %45 = arith.mulf %44, %37 : vector<16x128xf32>
    %46 = math.cos %39 : vector<16x128xf32>
    %47 = math.sin %39 : vector<16x128xf32>
    %48 = arith.mulf %15, %46 : vector<16x128xf32>
    %49 = arith.mulf %18, %47 : vector<16x128xf32>
    %50 = arith.subf %48, %49 : vector<16x128xf32>
    %51 = arith.mulf %45, %50 : vector<16x128xf32>
    %c0_27 = arith.constant 0 : index
    %c0_28 = arith.constant 0 : index
    %c0_29 = arith.constant 0 : index
    %52 = vector.load %arg5[%c0_27, %c0_28, %c0_29] : memref<1x16x128xf32, #tpu.memory_space<vmem>>, vector<1x16x128xf32>
    %53 = vector.shape_cast %52 : vector<1x16x128xf32> to vector<16x128xf32>
    %54 = vector.shape_cast %51 : vector<16x128xf32> to vector<1x16x128xf32>
    tpu.vector_store %arg5[%c0_27, %c0_28, %c0_29], %54 {strides = array<i32>} : memref<1x16x128xf32, #tpu.memory_space<vmem>>, vector<1x16x128xf32>,
    %55 = arith.mulf %15, %47 : vector<16x128xf32>
    %56 = arith.mulf %18, %46 : vector<16x128xf32>
    %57 = arith.addf %55, %56 : vector<16x128xf32>
    %58 = arith.mulf %45, %57 : vector<16x128xf32>
    %c0_30 = arith.constant 0 : index
    %c0_31 = arith.constant 0 : index
    %c0_32 = arith.constant 0 : index
    %59 = vector.load %arg6[%c0_30, %c0_31, %c0_32] : memref<1x16x128xf32, #tpu.memory_space<vmem>>, vector<1x16x128xf32>
    %60 = vector.shape_cast %59 : vector<1x16x128xf32> to vector<16x128xf32>
    %61 = vector.shape_cast %58 : vector<16x128xf32> to vector<1x16x128xf32>
    tpu.vector_store %arg6[%c0_30, %c0_31, %c0_32], %61 {strides = array<i32>} : memref<1x16x128xf32, #tpu.memory_space<vmem>>, vector<1x16x128xf32>,
    return
  }
  func.func @transform_0(%arg0: i32, %arg1: i32) -> (i32, i32, i32, i32) {
    %c0_i32 = arith.constant 0 : i32
    %c0_i32_0 = arith.constant 0 : i32
    %c0_i32_1 = arith.constant 0 : i32
    return %arg0, %c0_i32, %c0_i32_0, %arg1 : i32, i32, i32, i32
  }
  func.func @transform_1(%arg0: i32, %arg1: i32) -> (i32, i32, i32) {
    %c0_i32 = arith.constant 0 : i32
    %c0_i32_0 = arith.constant 0 : i32
    return %arg0, %c0_i32, %arg1 : i32, i32, i32
  }
  func.func @transform_2(%arg0: i32, %arg1: i32) -> (i32, i32, i32) {
    %c0_i32 = arith.constant 0 : i32
    %c0_i32_0 = arith.constant 0 : i32
    return %arg0, %c0_i32, %arg1 : i32, i32, i32
  }
  func.func @transform_3(%arg0: i32, %arg1: i32) -> (i32, i32, i32) {
    %c0_i32 = arith.constant 0 : i32
    %c0_i32_0 = arith.constant 0 : i32
    return %arg0, %c0_i32, %arg1 : i32, i32, i32
  }
  func.func @transform_4(%arg0: i32, %arg1: i32) -> (i32, i32, i32) {
    %c0_i32 = arith.constant 0 : i32
    %c0_i32_0 = arith.constant 0 : i32
    return %arg0, %c0_i32, %arg1 : i32, i32, i32
  }
}

</mosaic_0001>

<llo_original>
// kernel: tpu_custom_call.1
$region0: #{tpu_custom_call.1}
  #allocation0 [shape = 'u32[]', space=smem, size = 0x4, offset = 0x4, fixed_abs, tag = 'smem constant byte address 0x4 - core index']
  #allocation1 [shape = 'u32[144,128]{1,0:T(1,128)}', space=vmem, size = 0x12000, scoped, tag = 'internal scratch']
  %s0 = inlined_call_operand.hbm [shape: f32[2,5,16,256], index: 0, kind: input, shape index: {}]
  %s1 = inlined_call_operand.hbm [shape: f32[2,16,256], index: 1, kind: input, shape index: {}]
  %s2 = inlined_call_operand.hbm [shape: f32[2,16,256], index: 2, kind: input, shape index: {}]
  %s3 = inlined_call_operand.hbm [shape: f32[2,16,256], index: 3, kind: output, shape index: {0}]
  %s4 = inlined_call_operand.hbm [shape: f32[2,16,256], index: 4, kind: output, shape index: {1}]
  %5 = xla_tuple %s3, %s4
  %s6 = sld [smem:[#allocation0]]
  $region65: #{tpu_custom_call.1} parent=0
    _
  %s8 = ssub.s32 1, %s6
  %s9 = scalar_select 0, %s8, %s6
  $region1: #{tpu_custom_call.1} parent=0
    #allocation2 [shape = 'u8[81920]{0}', space=vmem, size = 0x14000, scoped, tag = 'input window, operand 0']
    #allocation3 [shape = 's32[2]{0}', space=sflag, size = 0x8, scoped, tag = 'scoped memory for tpu_custom_call.1']
    #allocation4 [shape = 's32[2]{0}', space=sflag, size = 0x8, scoped, tag = 'scoped memory for tpu_custom_call.1']
    #allocation5 [shape = 'u8[16384]{0}', space=vmem, size = 0x4000, scoped, tag = 'input window, operand 1']
    #allocation6 [shape = 's32[2]{0}', space=sflag, size = 0x8, scoped, tag = 'scoped memory for tpu_custom_call.1']
    #allocation7 [shape = 'u8[16384]{0}', space=vmem, size = 0x4000, scoped, tag = 'input window, operand 2']
    #allocation8 [shape = 'u8[16384]{0}', space=vmem, size = 0x4000, scoped, tag = 'output window, operand 0']
    #allocation9 [shape = 'u8[16384]{0}', space=vmem, size = 0x4000, scoped, tag = 'output window, operand 1']
    #allocation10 [shape = 's32[2]{0}', space=sflag, size = 0x8, scoped, tag = 'scoped memory for tpu_custom_call.1']
    %10 = vsyncpa [#allocation3], 0
    %s11 = scalar_lea.sflag [#allocation3], 1
    %12 = vsyncpa %s11, 0
    %13 = vsyncpa [#allocation6], 0
    %s14 = scalar_lea.sflag [#allocation6], 1
    %15 = vsyncpa %s14, 0
    %16 = vsyncpa [#allocation4], 0
    %s17 = scalar_lea.sflag [#allocation4], 1
    %18 = vsyncpa %s17, 0
    %19 = vsyncpa [#allocation10], 0
    %s20 = scalar_lea.sflag [#allocation10], 1
    %21 = vsyncpa %s20, 0
    loop: start=0, step=1, limit=6
    $region2: #{tpu_custom_call.1} parent=1 // loop_pre_header
      _
    $region3: #{tpu_custom_call.1} parent=1 // loop_header
      %s23 = sphi 0, %s27
      %p24 = scmp.ge.s32.totalorder %s23, 6
      %s30 = sphi 0, %s42
      %s31 = sphi 0, %s38
      %s32 = sphi 0, %s30
      %s33 = sphi 0, %s31
      %s34 = sphi 0, %s32
      %s35 = sphi 0, %s33
      %s47 = sphi 0, %s49
      %s50 = sphi 0, %s47
      %s51 = sphi 0, %s50
      %s67 = sphi 0, %s51
      %s75 = sphi 0, %s77
      %s78 = sphi 0, %s75
      %s79 = sphi 0, %s78
      %s95 = sphi 0, %s79
      %s103 = sphi 0, %s105
      %s106 = sphi 0, %s103
      %s107 = sphi 0, %s106
      %s123 = sphi 0, %s107
      %s131 = sphi 0, %s133
      %s134 = sphi 0, %s131
      %s135 = sphi 0, %s134
      %s151 = sphi 0, %s135
      %s159 = sphi 0, %s161
      %s162 = sphi 0, %s159
      %s163 = sphi 0, %s162
      %s179 = sphi 0, %s163
    $region4: #{tpu_custom_call.1} parent=1 // loop_header_branch
      %26 = sbr.rel (%p24) target = $region8
    $region5: #{tpu_custom_call.1} parent=1 // loop_body
      %s28 = ssub.s32 %s23, 1
      %s29 = ssub.s32 %s23, 2
      %s36 = sadd.s32 1, %s31
      %p37 = scmp.ge.s32.totalorder %s36, 2
      %s38 = scalar_select %p37, 0, %s36
      %s39 = sadd.s32 1, %s30
      %s40 = scalar_select %p37, %s39, %s30
      %p41 = scmp.ge.s32.totalorder %s40, 2
      %s42 = scalar_select %p41, 0, %s40
      %s43 = ssub.s32 %s30, %s42
      %s44 = ssub.s32 %s31, %s38
      %s45 = sor.u32 %s43, %s44
      %p46 = scmp.eq.s32.totalorder %s45, 0
      %s48 = sadd.s32 %s47, 1
      %s49 = scalar_select %p46, %s47, %s48
      %p52 = pneg %p46
      %p53 = scmp.eq.s32.totalorder %s23, 3
      %p54 = por %p52, %p53
      %p55 = scmp.ne.s32.totalorder %s47, %s50
      %p56 = scmp.eq.s32.totalorder %s23, 0
      %p57 = por %p55, %p56
      %p58 = scmp.ne.s32.totalorder %s47, %s50
      %p59 = scmp.eq.s32.totalorder %s28, 3
      %p60 = por %p58, %p59
      %p61 = scmp.ne.s32.totalorder %s50, %s51
      %p62 = scmp.eq.s32.totalorder %s28, 0
      %p63 = por %p61, %p62
      %p64 = scmp.ne.s32.totalorder %s50, %s51
      %p65 = scmp.eq.s32.totalorder %s29, 3
      %p66 = por %p64, %p65
      %p68 = scmp.ne.s32.totalorder %s51, %s67
      %p69 = scmp.eq.s32.totalorder %s29, 0
      %p70 = por %p68, %p69
      %s71 = ssub.s32 %s30, %s42
      %s72 = ssub.s32 %s31, %s38
      %s73 = sor.u32 %s71, %s72
      %p74 = scmp.eq.s32.totalorder %s73, 0
      %s76 = sadd.s32 %s75, 1
      %s77 = scalar_select %p74, %s75, %s76
      %p80 = pneg %p74
      %p81 = scmp.eq.s32.totalorder %s23, 3
      %p82 = por %p80, %p81
      %p83 = scmp.ne.s32.totalorder %s75, %s78
      %p84 = scmp.eq.s32.totalorder %s23, 0
      %p85 = por %p83, %p84
      %p86 = scmp.ne.s32.totalorder %s75, %s78
      %p87 = scmp.eq.s32.totalorder %s28, 3
      %p88 = por %p86, %p87
      %p89 = scmp.ne.s32.totalorder %s78, %s79
      %p90 = scmp.eq.s32.totalorder %s28, 0
      %p91 = por %p89, %p90
      %p92 = scmp.ne.s32.totalorder %s78, %s79
      %p93 = scmp.eq.s32.totalorder %s29, 3
      %p94 = por %p92, %p93
      %p96 = scmp.ne.s32.totalorder %s79, %s95
      %p97 = scmp.eq.s32.totalorder %s29, 0
      %p98 = por %p96, %p97
      %s99 = ssub.s32 %s30, %s42
      %s100 = ssub.s32 %s31, %s38
      %s101 = sor.u32 %s99, %s100
      %p102 = scmp.eq.s32.totalorder %s101, 0
      %s104 = sadd.s32 %s103, 1
      %s105 = scalar_select %p102, %s103, %s104
      %p108 = pneg %p102
      %p109 = scmp.eq.s32.totalorder %s23, 3
      %p110 = por %p108, %p109
      %p111 = scmp.ne.s32.totalorder %s103, %s106
      %p112 = scmp.eq.s32.totalorder %s23, 0
      %p113 = por %p111, %p112
      %p114 = scmp.ne.s32.totalorder %s103, %s106
      %p115 = scmp.eq.s32.totalorder %s28, 3
      %p116 = por %p114, %p115
      %p117 = scmp.ne.s32.totalorder %s106, %s107
      %p118 = scmp.eq.s32.totalorder %s28, 0
      %p119 = por %p117, %p118
      %p120 = scmp.ne.s32.totalorder %s106, %s107
      %p121 = scmp.eq.s32.totalorder %s29, 3
      %p122 = por %p120, %p121
      %p124 = scmp.ne.s32.totalorder %s107, %s123
      %p125 = scmp.eq.s32.totalorder %s29, 0
      %p126 = por %p124, %p125
      %s127 = ssub.s32 %s30, %s42
      %s128 = ssub.s32 %s31, %s38
      %s129 = sor.u32 %s127, %s128
      %p130 = scmp.eq.s32.totalorder %s129, 0
      %s132 = sadd.s32 %s131, 1
      %s133 = scalar_select %p130, %s131, %s132
      %p136 = pneg %p130
      %p137 = scmp.eq.s32.totalorder %s23, 3
      %p138 = por %p136, %p137
      %p139 = scmp.ne.s32.totalorder %s131, %s134
      %p140 = scmp.eq.s32.totalorder %s23, 0
      %p141 = por %p139, %p140
      %p142 = scmp.ne.s32.totalorder %s131, %s134
      %p143 = scmp.eq.s32.totalorder %s28, 3
      %p144 = por %p142, %p143
      %p145 = scmp.ne.s32.totalorder %s134, %s135
      %p146 = scmp.eq.s32.totalorder %s28, 0
      %p147 = por %p145, %p146
      %p148 = scmp.ne.s32.totalorder %s134, %s135
      %p149 = scmp.eq.s32.totalorder %s29, 3
      %p150 = por %p148, %p149
      %p152 = scmp.ne.s32.totalorder %s135, %s151
      %p153 = scmp.eq.s32.totalorder %s29, 0
      %p154 = por %p152, %p153
      %s155 = ssub.s32 %s30, %s42
      %s156 = ssub.s32 %s31, %s38
      %s157 = sor.u32 %s155, %s156
      %p158 = scmp.eq.s32.totalorder %s157, 0
      %s160 = sadd.s32 %s159, 1
      %s161 = scalar_select %p158, %s159, %s160
      %p164 = pneg %p158
      %p165 = scmp.eq.s32.totalorder %s23, 3
      %p166 = por %p164, %p165
      %p167 = scmp.ne.s32.totalorder %s159, %s162
      %p168 = scmp.eq.s32.totalorder %s23, 0
      %p169 = por %p167, %p168
      %p170 = scmp.ne.s32.totalorder %s159, %s162
      %p171 = scmp.eq.s32.totalorder %s28, 3
      %p172 = por %p170, %p171
      %p173 = scmp.ne.s32.totalorder %s162, %s163
      %p174 = scmp.eq.s32.totalorder %s28, 0
      %p175 = por %p173, %p174
      %p176 = scmp.ne.s32.totalorder %s162, %s163
      %p177 = scmp.eq.s32.totalorder %s29, 3
      %p178 = por %p176, %p177
      %p180 = scmp.ne.s32.totalorder %s163, %s179
      %p181 = scmp.eq.s32.totalorder %s29, 0
      %p182 = por %p180, %p181
      %p183 = scmp.le.s32.totalorder 1, %s23
      %p184 = scmp.lt.s32.totalorder %s23, 5
      %p185 = pnand %p183, %p184
      %p186 = pneg %p185
      // Predicated region
      $region9: #{tpu_custom_call.1} parent=5 // pred_check
        _
      $region10: #{tpu_custom_call.1} parent=5 // pred_check_branch
        %188 = sbr.rel (%p185) target = $region12
      $region11: #{tpu_custom_call.1} parent=5 // pred_region
        %s189 = ssub.s32 %s23, 1
      $region12: #{tpu_custom_call.1} parent=5 // pred_fallthru
        _
      %p190 = scmp.lt.s32.totalorder %s23, 4
      // Predicated region
      $region13: #{tpu_custom_call.1} parent=5 // pred_check
        %p191 = pneg %p190
      $region14: #{tpu_custom_call.1} parent=5 // pred_check_branch
        %193 = sbr.rel (%p191) target = $region16
      $region15: #{tpu_custom_call.1} parent=5 // pred_region
        // Predicated region
        $region17: #{tpu_custom_call.1} parent=15 // pred_check
          %p194 = pneg %p57
        $region18: #{tpu_custom_call.1} parent=15 // pred_check_branch
          %196 = sbr.rel (%p194) target = $region20
        $region19: #{tpu_custom_call.1} parent=15 // pred_region
          %s197 = sand.u32 %s47, 1
          %s198 = scalar_lea.sflag [#allocation3], %s197
          %s199 = sand.u32 %s47, 1
          %s200 = smul.addr %s199, 80
          %s201 = scalar_lea.vmem [#allocation2], %s200
          %s203 = ssub.s32 1280, 1280
          %204 = vsyncadd %s198, %s203
          %s205 = smul.addr %s30, 20
          %s206 = sadd.s32 %s31, %s205
          %s207 = smul.addr %s206, 128
          %s208 = scalar_lea.hbm %s0, %s207
          %s209 = sshll.u32 %s201, 4
          %s210 = int_to_ptr.vmem [resolvable:$true] %s209
          %215 = dma.hbm_to_vmem [thread:$0]  %s208, 1280, %s210, %s198, 256, 128, 8
        $region20: #{tpu_custom_call.1} parent=15 // pred_fallthru
          _
        // Predicated region
        $region21: #{tpu_custom_call.1} parent=15 // pred_check
          %p216 = pneg %p85
        $region22: #{tpu_custom_call.1} parent=15 // pred_check_branch
          %218 = sbr.rel (%p216) target = $region24
        $region23: #{tpu_custom_call.1} parent=15 // pred_region
          %s219 = sand.u32 %s23, 1
          %s220 = scalar_lea.sflag [#allocation6], %s219
          %s221 = sand.u32 %s75, 1
          %s222 = smul.addr %s221, 16
          %s223 = scalar_lea.vmem [#allocation5], %s222
          %s225 = ssub.s32 256, 256
          %226 = vsyncadd %s220, %s225
          %s227 = smul.addr %s30, 4
          %s228 = sadd.s32 %s31, %s227
          %s229 = smul.addr %s228, 128
          %s230 = scalar_lea.hbm %s1, %s229
          %s231 = sshll.u32 %s223, 4
          %s232 = int_to_ptr.vmem [resolvable:$true] %s231
          %237 = dma.hbm_to_vmem [thread:$0]  %s230, 256, %s232, %s220, 256, 128, 8
        $region24: #{tpu_custom_call.1} parent=15 // pred_fallthru
          _
        // Predicated region
        $region25: #{tpu_custom_call.1} parent=15 // pred_check
          %p238 = pneg %p113
        $region26: #{tpu_custom_call.1} parent=15 // pred_check_branch
          %240 = sbr.rel (%p238) target = $region28
        $region27: #{tpu_custom_call.1} parent=15 // pred_region
          %s241 = sand.u32 %s23, 1
          %s242 = scalar_lea.sflag [#allocation6], %s241
          %s243 = sand.u32 %s103, 1
          %s244 = smul.addr %s243, 16
          %s245 = scalar_lea.vmem [#allocation7], %s244
          %s247 = ssub.s32 256, 256
          %248 = vsyncadd %s242, %s247
          %s249 = smul.addr %s30, 4
          %s250 = sadd.s32 %s31, %s249
          %s251 = smul.addr %s250, 128
          %s252 = scalar_lea.hbm %s2, %s251
          %s253 = sshll.u32 %s245, 4
          %s254 = int_to_ptr.vmem [resolvable:$true] %s253
          %259 = dma.hbm_to_vmem [thread:$0]  %s252, 256, %s254, %s242, 256, 128, 8
        $region28: #{tpu_custom_call.1} parent=15 // pred_fallthru
          _
      $region16: #{tpu_custom_call.1} parent=5 // pred_fallthru
        _
      %p260 = scmp.le.s32.totalorder 1, %s23
      %p261 = scmp.lt.s32.totalorder %s23, 5
      %p262 = pnand %p260, %p261
      %p263 = pneg %p262
      // Predicated region
      $region29: #{tpu_custom_call.1} parent=5 // pred_check
        _
      $region30: #{tpu_custom_call.1} parent=5 // pred_check_branch
        %265 = sbr.rel (%p262) target = $region32
      $region31: #{tpu_custom_call.1} parent=5 // pred_region
        %s266 = ssub.s32 %s23, 1
        %s267 = sand.u32 %s50, 1
        %s268 = scalar_lea.sflag [#allocation3], %s267
        %s269 = sand.u32 %s50, 1
        %s270 = smul.addr %s269, 80
        %s271 = scalar_lea.vmem [#allocation2], %s270
        // Predicated region
        $region33: #{tpu_custom_call.1} parent=31 // pred_check
          %p272 = pneg %p63
        $region34: #{tpu_custom_call.1} parent=31 // pred_check_branch
          %274 = sbr.rel (%p272) target = $region36
        $region35: #{tpu_custom_call.1} parent=31 // pred_region
          %275 = dma.done %s268, 1280
        $region36: #{tpu_custom_call.1} parent=31 // pred_fallthru
          _
        %s276 = sand.u32 %s28, 1
        %s277 = scalar_lea.sflag [#allocation6], %s276
        %s278 = sand.u32 %s78, 1
        %s279 = smul.addr %s278, 16
        %s280 = scalar_lea.vmem [#allocation5], %s279
        // Predicated region
        $region37: #{tpu_custom_call.1} parent=31 // pred_check
          %p281 = pneg %p91
        $region38: #{tpu_custom_call.1} parent=31 // pred_check_branch
          %283 = sbr.rel (%p281) target = $region40
        $region39: #{tpu_custom_call.1} parent=31 // pred_region
          %284 = dma.done %s277, 256
        $region40: #{tpu_custom_call.1} parent=31 // pred_fallthru
          _
        %s285 = sand.u32 %s28, 1
        %s286 = scalar_lea.sflag [#allocation6], %s285
        %s287 = sand.u32 %s106, 1
        %s288 = smul.addr %s287, 16
        %s289 = scalar_lea.vmem [#allocation7], %s288
        // Predicated region
        $region41: #{tpu_custom_call.1} parent=31 // pred_check
          %p290 = pneg %p119
        $region42: #{tpu_custom_call.1} parent=31 // pred_check_branch
          %292 = sbr.rel (%p290) target = $region44
        $region43: #{tpu_custom_call.1} parent=31 // pred_region
          %293 = dma.done %s286, 256
        $region44: #{tpu_custom_call.1} parent=31 // pred_fallthru
          _
        %s294 = sand.u32 %s50, 1
        %s295 = scalar_lea.sflag [#allocation3], %s294
        %s296 = sand.u32 %s50, 1
        %s297 = smul.addr %s296, 80
        %s298 = scalar_lea.vmem [#allocation2], %s297
        %p299 = pneg %p63
        %p300 = pneg %p60
        %s301 = sand.u32 %s28, 1
        %s302 = scalar_lea.sflag [#allocation6], %s301
        %s303 = sand.u32 %s78, 1
        %s304 = smul.addr %s303, 16
        %s305 = scalar_lea.vmem [#allocation5], %s304
        %p306 = pneg %p91
        %p307 = pneg %p88
        %s308 = sand.u32 %s28, 1
        %s309 = scalar_lea.sflag [#allocation6], %s308
        %s310 = sand.u32 %s106, 1
        %s311 = smul.addr %s310, 16
        %s312 = scalar_lea.vmem [#allocation7], %s311
        %p313 = pneg %p119
        %p314 = pneg %p116
        %p315 = pneg %p147
        %p316 = pneg %p144
        %s317 = sand.u32 %s134, 1
        %s318 = scalar_lea.sflag [#allocation4], %s317
        %s319 = sand.u32 %s134, 1
        %s320 = smul.addr %s319, 16
        %s321 = scalar_lea.vmem [#allocation8], %s320
        %p322 = pneg %p175
        %p323 = pneg %p172
        %s324 = sand.u32 %s162, 1
        %s325 = scalar_lea.sflag [#allocation10], %s324
        %s326 = sand.u32 %s162, 1
        %s327 = smul.addr %s326, 16
        %s328 = scalar_lea.vmem [#allocation9], %s327
        %v329 = vld [vmem:[%s280] sm:$0xff]
        %v330 = vld [vmem:[%s280 + $0x8] sm:$0xff]
        %v331 = vld [vmem:[%s289] sm:$0xff]
        %v332 = vld [vmem:[%s289 + $0x8] sm:$0xff]
        %v333 = vmul.f32 %v329, %v329
        %v334 = vmul.f32 %v330, %v330
        %v335 = vmul.f32 %v331, %v331
        %v336 = vmul.f32 %v332, %v332
        %v337 = vadd.f32 %v333, %v335
        %v338 = vadd.f32 %v334, %v336
        %vm339 = vcmp.gt.f32.partialorder %v337, 0.0
        %vm340 = vcmp.gt.f32.partialorder %v338, 0.0
        %v341 = vsel %vm339, %v337, 1.0
        %v342 = vsel %vm340, %v338, 1.0
        %v343 = vrsqrt.pop %v341
        %v344 = vrsqrt.pop %v342
        %v345 = vmul.f32 %v337, %v343
        %v346 = vmul.f32 %v338, %v344
        %v347 = vmul.f32 %v329, %v343
        %v348 = vmul.f32 %v330, %v344
        %v349 = vsel %vm339, %v347, 1.0
        %v350 = vsel %vm340, %v348, 1.0
        %v351 = vmul.f32 %v331, %v343
        %v352 = vmul.f32 %v332, %v344
        %v353 = vsel %vm339, %v351, 0.0
        %v354 = vsel %vm340, %v352, 0.0
        %v355 = vlaneseq
        %v356 = vshrl.u32 %v355, 7
        %v357 = vadd.s32 %v356, 8
        %vm358 = vcmp.eq.s32.totalorder %v356, 0
        %vm359 = vcmp.eq.s32.totalorder %v357, 0
        %v360 = vrot.slane %v345, 7
        %v361 = vrot.slane %v346, 7
        %vm362 = vcmp.lt.s32.totalorder %v356, 1
        %v363 = vsel %vm362, %v360, %v361
        %v364 = vsel %vm362, %v361, %v360
        %v365 = vsel %vm358, 0.0, %v364
        %v366 = vsel %vm359, 0.0, %v363
        %vm367 = vcmp.eq.s32.totalorder %v356, 15
        %vm368 = vcmp.eq.s32.totalorder %v357, 15
        %v369 = vrot.slane %v345, 1
        %v370 = vrot.slane %v346, 1
        %vm371 = vcmp.lt.s32.totalorder %v356, 7
        %v372 = vsel %vm371, %v369, %v370
        %v373 = vsel %vm371, %v370, %v369
        %v374 = vsel %vm367, 0.0, %v372
        %v375 = vsel %vm368, 0.0, %v373
        %v376 = vld [vmem:[%s271] sm:$0xff]
        %v377 = vld [vmem:[%s271 + $0x8] sm:$0xff]
        %s378 = scalar_lea.vmem %s271, 16 [#allocation2]
        %v379 = vld [vmem:[%s378] sm:$0xff]
        %v380 = vld [vmem:[%s378 + $0x8] sm:$0xff]
        %s381 = scalar_lea.vmem %s271, 32 [#allocation2]
        %v382 = vld [vmem:[%s381] sm:$0xff]
        %v383 = vld [vmem:[%s381 + $0x8] sm:$0xff]
        %s384 = scalar_lea.vmem %s271, 48 [#allocation2]
        %v385 = vld [vmem:[%s384] sm:$0xff]
        %v386 = vld [vmem:[%s384 + $0x8] sm:$0xff]
        %s387 = scalar_lea.vmem %s271, 64 [#allocation2]
        %v388 = vld [vmem:[%s387] sm:$0xff]
        %v389 = vld [vmem:[%s387 + $0x8] sm:$0xff]
        %v390 = vmul.f32 %v365, %v376
        %v391 = vmul.f32 %v366, %v377
        %v392 = vmul.f32 %v345, %v379
        %v393 = vmul.f32 %v346, %v380
        %v394 = vadd.f32 %v390, %v392
        %v395 = vadd.f32 %v391, %v393
        %v396 = vmul.f32 %v374, %v382
        %v397 = vmul.f32 %v375, %v383
        %v398 = vadd.f32 %v394, %v396
        %v399 = vadd.f32 %v395, %v397
        %v400 = vmul.f32 %v398, %v385
        %v401 = vmul.f32 %v399, %v386
        %v402 = vand.u32 2147483647, %v388
        %vm403 = vcmp.le.f32.partialorder %v402, 0.7853982
        %vm404 = vcmp.lt.s32.totalorder %v388, 0
        %v405 = vand.u32 %v388, 2139095040
        %v406 = vshrl.u32 %v405, 23
        %v407 = vsub.s32 %v406, 127
        %v408 = vand.u32 2147483647, %v388
        %v409 = vand.u32 %v408, 8388607
        %v410 = vor.u32 %v409, 8388608
        %v411 = vsub.s32 0, %v410
        %v412 = vadd.s32 %v407, 1
        %vm413 = vcmp.gt.s32.totalorder %v412, 0
        %v414 = vsel %vm413, %v412, 0
        %v415 = vshrl.u32 %v414, 5
        %v416 = vand.u32 %v414, 31
        %v417 = vsub.s32 32, %v416
        %v418 = vshrl.u32 683565275, %v417
        %v419 = vshll.u32 683565275, %v416
        %v420 = vshrl.u32 2475754826, %v417
        %v421 = vor.u32 %v419, %v420
        %v422 = vshll.u32 2475754826, %v416
        %v423 = vshrl.u32 2131351028, %v417
        %v424 = vor.u32 %v422, %v423
        %v425 = vshll.u32 2131351028, %v416
        %v426 = vshrl.u32 2102212464, %v417
        %v427 = vor.u32 %v425, %v426
        %v428 = vshll.u32 2102212464, %v416
        %v429 = vshrl.u32 920167782, %v417
        %v430 = vor.u32 %v428, %v429
        %v431 = vshll.u32 920167782, %v416
        %v432 = vshrl.u32 1326507024, %v417
        %v433 = vor.u32 %v431, %v432
        %vm434 = vcmp.lt.s32.totalorder %v415, 1
        %vm435 = vcmp.lt.s32.totalorder %v415, 2
        %vm436 = vcmp.lt.s32.totalorder %v415, 3
        %vm437 = vcmp.lt.s32.totalorder %v415, 4
        %v438 = vsel %vm434, %v418, %v421
        %v439 = vsel %vm437, %v427, 2102212464
        %v440 = vsel %vm436, %v424, %v439
        %v441 = vsel %vm435, %v438, %v440
        %v442 = vsel %vm434, %v421, %v424
        %v443 = vsel %vm437, %v430, 920167782
        %v444 = vsel %vm436, %v427, %v443
        %v445 = vsel %vm435, %v442, %v444
        %v446 = vsel %vm434, %v424, %v427
        %v447 = vsel %vm437, %v433, 1326507024
        %v448 = vsel %vm436, %v430, %v447
        %v449 = vsel %vm435, %v446, %v448
        %v450 = vshll.u32 %v410, 8
        %v451 = vmul.u32.u64.compose %v450, %v449
        %v452 = vextract.low.u32 %v451
        %v453 = vextract.high.u32 %v451
        %v454 = vmul.u32.u64.compose %v450, %v445
        %v455 = vextract.low.u32 %v454
        %v456 = vextract.high.u32 %v454
        %v457 = vmul.u32 %v450, %v441
        %v458 = vadd.s32 %v453, %v455
        %vm459 = vc.u32 %v453, %v455
        %v460 = vadd.s32 %v456, 1
        %v461 = vsel %vm459, %v460, %v456
        %v462 = vadd.s32 %v457, %v461
        %v463 = vadd.s32 %v462, 536870912
        %v464 = vshrl.u32 %v463, 30
        %v465 = vshll.u32 %v464, 30
        %v466 = vsub.s32 %v462, %v465
        %vm467 = vcmp.lt.s32.totalorder %v466, 0
        %v468 = vsub.s32 0, %v466
        %v469 = vsel %vm467, %v468, %v466
        %v470 = vclz %v469
        %v471 = vsub.s32 %v470, 2
        %vm472 = vcmp.gt.s32.totalorder 0, %v471
        %v473 = vsel %vm472, 0, %v471
        %v474 = vsub.s32 32, %v473
        %v475 = vshll.u32 %v466, %v473
        %v476 = vshrl.u32 %v458, %v474
        %v477 = vor.u32 %v475, %v476
        %v478 = vsub.s32 4294967266, %v473
        %v479 = vadd.s32 %v478, 127
        %v480 = vshll.u32 %v479, 23
        %v481 = vor.u32 4788187, %v480
        %v482 = vand.u32 2147483647, %v481
        %v484 = vcvt.s32.f32 %v477
        %v485 = vmul.f32 %v484, %v482
        %v486 = vxor.u32 %v485, 2147483648
        %v487 = vsel %vm404, %v486, %v485
        %v488 = vsub.s32 4, %v464
        %v489 = vsel %vm404, %v488, %v464
        %v490 = vsel %vm403, %v388, %v487
        %v491 = vsel %vm403, 0, %v489
        %v492 = vcosq.f32.pop %v490
        %v493 = vsinq.f32.pop %v490
        %vm494 = vweird.f32 %v388
        %v495 = vand.u32 %v491, 3
        %vm496 = vcmp.lt.s32.totalorder %v495, 2
        %vm497 = vcmp.eq.s32.totalorder %v495, 0
        %v498 = vxor.u32 %v493, 2147483648
        %v499 = vsel %vm497, %v492, %v498
        %vm500 = vcmp.eq.s32.totalorder %v495, 2
        %v501 = vxor.u32 %v492, 2147483648
        %v502 = vsel %vm500, %v501, %v493
        %v503 = vsel %vm496, %v499, %v502
        %v504 = vsel %vm494, nan, %v503
        %v505 = vand.u32 2147483647, %v389
        %vm506 = vcmp.le.f32.partialorder %v505, 0.7853982
        %vm507 = vcmp.lt.s32.totalorder %v389, 0
        %v508 = vand.u32 %v389, 2139095040
        %v509 = vshrl.u32 %v508, 23
        %v510 = vsub.s32 %v509, 127
        %v511 = vand.u32 2147483647, %v389
        %v512 = vand.u32 %v511, 8388607
        %v513 = vor.u32 %v512, 8388608
        %v514 = vsub.s32 0, %v513
        %v515 = vadd.s32 %v510, 1
        %vm516 = vcmp.gt.s32.totalorder %v515, 0
        %v517 = vsel %vm516, %v515, 0
        %v518 = vshrl.u32 %v517, 5
        %v519 = vand.u32 %v517, 31
        %v520 = vsub.s32 32, %v519
        %v521 = vshrl.u32 683565275, %v520
        %v522 = vshll.u32 683565275, %v519
        %v523 = vshrl.u32 2475754826, %v520
        %v524 = vor.u32 %v522, %v523
        %v525 = vshll.u32 2475754826, %v519
        %v526 = vshrl.u32 2131351028, %v520
        %v527 = vor.u32 %v525, %v526
        %v528 = vshll.u32 2131351028, %v519
        %v529 = vshrl.u32 2102212464, %v520
        %v530 = vor.u32 %v528, %v529
        %v531 = vshll.u32 2102212464, %v519
        %v532 = vshrl.u32 920167782, %v520
        %v533 = vor.u32 %v531, %v532
        %v534 = vshll.u32 920167782, %v519
        %v535 = vshrl.u32 1326507024, %v520
        %v536 = vor.u32 %v534, %v535
        %vm537 = vcmp.lt.s32.totalorder %v518, 1
        %vm538 = vcmp.lt.s32.totalorder %v518, 2
        %vm539 = vcmp.lt.s32.totalorder %v518, 3
        %vm540 = vcmp.lt.s32.totalorder %v518, 4
        %v541 = vsel %vm537, %v521, %v524
        %v542 = vsel %vm540, %v530, 2102212464
        %v543 = vsel %vm539, %v527, %v542
        %v544 = vsel %vm538, %v541, %v543
        %v545 = vsel %vm537, %v524, %v527
        %v546 = vsel %vm540, %v533, 920167782
        %v547 = vsel %vm539, %v530, %v546
        %v548 = vsel %vm538, %v545, %v547
        %v549 = vsel %vm537, %v527, %v530
        %v550 = vsel %vm540, %v536, 1326507024
        %v551 = vsel %vm539, %v533, %v550
        %v552 = vsel %vm538, %v549, %v551
        %v553 = vshll.u32 %v513, 8
        %v554 = vmul.u32.u64.compose %v553, %v552
        %v555 = vextract.low.u32 %v554
        %v556 = vextract.high.u32 %v554
        %v557 = vmul.u32.u64.compose %v553, %v548
        %v558 = vextract.low.u32 %v557
        %v559 = vextract.high.u32 %v557
        %v560 = vmul.u32 %v553, %v544
        %v561 = vadd.s32 %v556, %v558
        %vm562 = vc.u32 %v556, %v558
        %v563 = vadd.s32 %v559, 1
        %v564 = vsel %vm562, %v563, %v559
        %v565 = vadd.s32 %v560, %v564
        %v566 = vadd.s32 %v565, 536870912
        %v567 = vshrl.u32 %v566, 30
        %v568 = vshll.u32 %v567, 30
        %v569 = vsub.s32 %v565, %v568
        %vm570 = vcmp.lt.s32.totalorder %v569, 0
        %v571 = vsub.s32 0, %v569
        %v572 = vsel %vm570, %v571, %v569
        %v573 = vclz %v572
        %v574 = vsub.s32 %v573, 2
        %vm575 = vcmp.gt.s32.totalorder 0, %v574
        %v576 = vsel %vm575, 0, %v574
        %v577 = vsub.s32 32, %v576
        %v578 = vshll.u32 %v569, %v576
        %v579 = vshrl.u32 %v561, %v577
        %v580 = vor.u32 %v578, %v579
        %v581 = vsub.s32 4294967266, %v576
        %v582 = vadd.s32 %v581, 127
        %v583 = vshll.u32 %v582, 23
        %v584 = vor.u32 4788187, %v583
        %v585 = vand.u32 2147483647, %v584
        %v587 = vcvt.s32.f32 %v580
        %v588 = vmul.f32 %v587, %v585
        %v589 = vxor.u32 %v588, 2147483648
        %v590 = vsel %vm507, %v589, %v588
        %v591 = vsub.s32 4, %v567
        %v592 = vsel %vm507, %v591, %v567
        %v593 = vsel %vm506, %v389, %v590
        %v594 = vsel %vm506, 0, %v592
        %v595 = vcosq.f32.pop %v593
        %v596 = vsinq.f32.pop %v593
        %vm597 = vweird.f32 %v389
        %v598 = vand.u32 %v594, 3
        %vm599 = vcmp.lt.s32.totalorder %v598, 2
        %vm600 = vcmp.eq.s32.totalorder %v598, 0
        %v601 = vxor.u32 %v596, 2147483648
        %v602 = vsel %vm600, %v595, %v601
        %vm603 = vcmp.eq.s32.totalorder %v598, 2
        %v604 = vxor.u32 %v595, 2147483648
        %v605 = vsel %vm603, %v604, %v596
        %v606 = vsel %vm599, %v602, %v605
        %v607 = vsel %vm597, nan, %v606
        %v608 = vand.u32 2147483647, %v388
        %vm609 = vcmp.le.f32.partialorder %v608, 0.7853982
        %vm610 = vcmp.lt.s32.totalorder %v388, 0
        %v611 = vand.u32 %v388, 2139095040
        %v612 = vshrl.u32 %v611, 23
        %v613 = vsub.s32 %v612, 127
        %v614 = vand.u32 2147483647, %v388
        %v615 = vand.u32 %v614, 8388607
        %v616 = vor.u32 %v615, 8388608
        %v617 = vsub.s32 0, %v616
        %v618 = vadd.s32 %v613, 1
        %vm619 = vcmp.gt.s32.totalorder %v618, 0
        %v620 = vsel %vm619, %v618, 0
        %v621 = vshrl.u32 %v620, 5
        %v622 = vand.u32 %v620, 31
        %v623 = vsub.s32 32, %v622
        %v624 = vshrl.u32 683565275, %v623
        %v625 = vshll.u32 683565275, %v622
        %v626 = vshrl.u32 2475754826, %v623
        %v627 = vor.u32 %v625, %v626
        %v628 = vshll.u32 2475754826, %v622
        %v629 = vshrl.u32 2131351028, %v623
        %v630 = vor.u32 %v628, %v629
        %v631 = vshll.u32 2131351028, %v622
        %v632 = vshrl.u32 2102212464, %v623
        %v633 = vor.u32 %v631, %v632
        %v634 = vshll.u32 2102212464, %v622
        %v635 = vshrl.u32 920167782, %v623
        %v636 = vor.u32 %v634, %v635
        %v637 = vshll.u32 920167782, %v622
        %v638 = vshrl.u32 1326507024, %v623
        %v639 = vor.u32 %v637, %v638
        %vm640 = vcmp.lt.s32.totalorder %v621, 1
        %vm641 = vcmp.lt.s32.totalorder %v621, 2
        %vm642 = vcmp.lt.s32.totalorder %v621, 3
        %vm643 = vcmp.lt.s32.totalorder %v621, 4
        %v644 = vsel %vm640, %v624, %v627
        %v645 = vsel %vm643, %v633, 2102212464
        %v646 = vsel %vm642, %v630, %v645
        %v647 = vsel %vm641, %v644, %v646
        %v648 = vsel %vm640, %v627, %v630
        %v649 = vsel %vm643, %v636, 920167782
        %v650 = vsel %vm642, %v633, %v649
        %v651 = vsel %vm641, %v648, %v650
        %v652 = vsel %vm640, %v630, %v633
        %v653 = vsel %vm643, %v639, 1326507024
        %v654 = vsel %vm642, %v636, %v653
        %v655 = vsel %vm641, %v652, %v654
        %v656 = vshll.u32 %v616, 8
        %v657 = vmul.u32.u64.compose %v656, %v655
        %v658 = vextract.low.u32 %v657
        %v659 = vextract.high.u32 %v657
        %v660 = vmul.u32.u64.compose %v656, %v651
        %v661 = vextract.low.u32 %v660
        %v662 = vextract.high.u32 %v660
        %v663 = vmul.u32 %v656, %v647
        %v664 = vadd.s32 %v659, %v661
        %vm665 = vc.u32 %v659, %v661
        %v666 = vadd.s32 %v662, 1
        %v667 = vsel %vm665, %v666, %v662
        %v668 = vadd.s32 %v663, %v667
        %v669 = vadd.s32 %v668, 536870912
        %v670 = vshrl.u32 %v669, 30
        %v671 = vshll.u32 %v670, 30
        %v672 = vsub.s32 %v668, %v671
        %vm673 = vcmp.lt.s32.totalorder %v672, 0
        %v674 = vsub.s32 0, %v672
        %v675 = vsel %vm673, %v674, %v672
        %v676 = vclz %v675
        %v677 = vsub.s32 %v676, 2
        %vm678 = vcmp.gt.s32.totalorder 0, %v677
        %v679 = vsel %vm678, 0, %v677
        %v680 = vsub.s32 32, %v679
        %v681 = vshll.u32 %v672, %v679
        %v682 = vshrl.u32 %v664, %v680
        %v683 = vor.u32 %v681, %v682
        %v684 = vsub.s32 4294967266, %v679
        %v685 = vadd.s32 %v684, 127
        %v686 = vshll.u32 %v685, 23
        %v687 = vor.u32 4788187, %v686
        %v688 = vand.u32 2147483647, %v687
        %v690 = vcvt.s32.f32 %v683
        %v691 = vmul.f32 %v690, %v688
        %v692 = vxor.u32 %v691, 2147483648
        %v693 = vsel %vm610, %v692, %v691
        %v694 = vsub.s32 4, %v670
        %v695 = vsel %vm610, %v694, %v670
        %v696 = vsel %vm609, %v388, %v693
        %v697 = vsel %vm609, 0, %v695
        %v698 = vcosq.f32.pop %v696
        %v699 = vsinq.f32.pop %v696
        %vm700 = vweird.f32 %v388
        %v701 = vadd.s32 %v697, 3
        %v702 = vand.u32 %v701, 3
        %vm703 = vcmp.lt.s32.totalorder %v702, 2
        %vm704 = vcmp.eq.s32.totalorder %v702, 0
        %v705 = vxor.u32 %v699, 2147483648
        %v706 = vsel %vm704, %v698, %v705
        %vm707 = vcmp.eq.s32.totalorder %v702, 2
        %v708 = vxor.u32 %v698, 2147483648
        %v709 = vsel %vm707, %v708, %v699
        %v710 = vsel %vm703, %v706, %v709
        %v711 = vsel %vm700, nan, %v710
        %v712 = vand.u32 2147483647, %v389
        %vm713 = vcmp.le.f32.partialorder %v712, 0.7853982
        %vm714 = vcmp.lt.s32.totalorder %v389, 0
        %v715 = vand.u32 %v389, 2139095040
        %v716 = vshrl.u32 %v715, 23
        %v717 = vsub.s32 %v716, 127
        %v718 = vand.u32 2147483647, %v389
        %v719 = vand.u32 %v718, 8388607
        %v720 = vor.u32 %v719, 8388608
        %v721 = vsub.s32 0, %v720
        %v722 = vadd.s32 %v717, 1
        %vm723 = vcmp.gt.s32.totalorder %v722, 0
        %v724 = vsel %vm723, %v722, 0
        %v725 = vshrl.u32 %v724, 5
        %v726 = vand.u32 %v724, 31
        %v727 = vsub.s32 32, %v726
        %v728 = vshrl.u32 683565275, %v727
        %v729 = vshll.u32 683565275, %v726
        %v730 = vshrl.u32 2475754826, %v727
        %v731 = vor.u32 %v729, %v730
        %v732 = vshll.u32 2475754826, %v726
        %v733 = vshrl.u32 2131351028, %v727
        %v734 = vor.u32 %v732, %v733
        %v735 = vshll.u32 2131351028, %v726
        %v736 = vshrl.u32 2102212464, %v727
        %v737 = vor.u32 %v735, %v736
        %v738 = vshll.u32 2102212464, %v726
        %v739 = vshrl.u32 920167782, %v727
        %v740 = vor.u32 %v738, %v739
        %v741 = vshll.u32 920167782, %v726
        %v742 = vshrl.u32 1326507024, %v727
        %v743 = vor.u32 %v741, %v742
        %vm744 = vcmp.lt.s32.totalorder %v725, 1
        %vm745 = vcmp.lt.s32.totalorder %v725, 2
        %vm746 = vcmp.lt.s32.totalorder %v725, 3
        %vm747 = vcmp.lt.s32.totalorder %v725, 4
        %v748 = vsel %vm744, %v728, %v731
        %v749 = vsel %vm747, %v737, 2102212464
        %v750 = vsel %vm746, %v734, %v749
        %v751 = vsel %vm745, %v748, %v750
        %v752 = vsel %vm744, %v731, %v734
        %v753 = vsel %vm747, %v740, 920167782
        %v754 = vsel %vm746, %v737, %v753
        %v755 = vsel %vm745, %v752, %v754
        %v756 = vsel %vm744, %v734, %v737
        %v757 = vsel %vm747, %v743, 1326507024
        %v758 = vsel %vm746, %v740, %v757
        %v759 = vsel %vm745, %v756, %v758
        %v760 = vshll.u32 %v720, 8
        %v761 = vmul.u32.u64.compose %v760, %v759
        %v762 = vextract.low.u32 %v761
        %v763 = vextract.high.u32 %v761
        %v764 = vmul.u32.u64.compose %v760, %v755
        %v765 = vextract.low.u32 %v764
        %v766 = vextract.high.u32 %v764
        %v767 = vmul.u32 %v760, %v751
        %v768 = vadd.s32 %v763, %v765
        %vm769 = vc.u32 %v763, %v765
        %v770 = vadd.s32 %v766, 1
        %v771 = vsel %vm769, %v770, %v766
        %v772 = vadd.s32 %v767, %v771
        %v773 = vadd.s32 %v772, 536870912
        %v774 = vshrl.u32 %v773, 30
        %v775 = vshll.u32 %v774, 30
        %v776 = vsub.s32 %v772, %v775
        %vm777 = vcmp.lt.s32.totalorder %v776, 0
        %v778 = vsub.s32 0, %v776
        %v779 = vsel %vm777, %v778, %v776
        %v780 = vclz %v779
        %v781 = vsub.s32 %v780, 2
        %vm782 = vcmp.gt.s32.totalorder 0, %v781
        %v783 = vsel %vm782, 0, %v781
        %v784 = vsub.s32 32, %v783
        %v785 = vshll.u32 %v776, %v783
        %v786 = vshrl.u32 %v768, %v784
        %v787 = vor.u32 %v785, %v786
        %v788 = vsub.s32 4294967266, %v783
        %v789 = vadd.s32 %v788, 127
        %v790 = vshll.u32 %v789, 23
        %v791 = vor.u32 4788187, %v790
        %v792 = vand.u32 2147483647, %v791
        %v794 = vcvt.s32.f32 %v787
        %v795 = vmul.f32 %v794, %v792
        %v796 = vxor.u32 %v795, 2147483648
        %v797 = vsel %vm714, %v796, %v795
        %v798 = vsub.s32 4, %v774
        %v799 = vsel %vm714, %v798, %v774
        %v800 = vsel %vm713, %v389, %v797
        %v801 = vsel %vm713, 0, %v799
        %v802 = vcosq.f32.pop %v800
        %v803 = vsinq.f32.pop %v800
        %vm804 = vweird.f32 %v389
        %v805 = vadd.s32 %v801, 3
        %v806 = vand.u32 %v805, 3
        %vm807 = vcmp.lt.s32.totalorder %v806, 2
        %vm808 = vcmp.eq.s32.totalorder %v806, 0
        %v809 = vxor.u32 %v803, 2147483648
        %v810 = vsel %vm808, %v802, %v809
        %vm811 = vcmp.eq.s32.totalorder %v806, 2
        %v812 = vxor.u32 %v802, 2147483648
        %v813 = vsel %vm811, %v812, %v803
        %v814 = vsel %vm807, %v810, %v813
        %v815 = vsel %vm804, nan, %v814
        %v816 = vmul.f32 %v349, %v504
        %v817 = vmul.f32 %v350, %v607
        %v818 = vmul.f32 %v353, %v711
        %v819 = vmul.f32 %v354, %v815
        %v820 = vsub.f32 %v816, %v818
        %v821 = vsub.f32 %v817, %v819
        %v822 = vmul.f32 %v400, %v820
        %v823 = vmul.f32 %v401, %v821
        %824 = vst [vmem:[%s321] sm:$0xff] %v822
        %825 = vst [vmem:[%s321 + $0x8] sm:$0xff] %v823
        %v826 = vmul.f32 %v349, %v711
        %v827 = vmul.f32 %v350, %v815
        %v828 = vmul.f32 %v353, %v504
        %v829 = vmul.f32 %v354, %v607
        %v830 = vadd.f32 %v826, %v828
        %v831 = vadd.f32 %v827, %v829
        %v832 = vmul.f32 %v400, %v830
        %v833 = vmul.f32 %v401, %v831
        %834 = vst [vmem:[%s328] sm:$0xff] %v832
        %835 = vst [vmem:[%s328 + $0x8] sm:$0xff] %v833
        %s836 = sand.u32 %s134, 1
        %s837 = scalar_lea.sflag [#allocation4], %s836
        %s838 = sand.u32 %s134, 1
        %s839 = smul.addr %s838, 16
        %s840 = scalar_lea.vmem [#allocation8], %s839
        %s841 = sand.u32 %s162, 1
        %s842 = scalar_lea.sflag [#allocation10], %s841
        %s843 = sand.u32 %s162, 1
        %s844 = smul.addr %s843, 16
        %s845 = scalar_lea.vmem [#allocation9], %s844
        // Predicated region
        $region45: #{tpu_custom_call.1} parent=31 // pred_check
          %p846 = pneg %p144
        $region46: #{tpu_custom_call.1} parent=31 // pred_check_branch
          %848 = sbr.rel (%p846) target = $region48
        $region47: #{tpu_custom_call.1} parent=31 // pred_region
          %s850 = ssub.s32 256, 256
          %851 = vsyncadd %s837, %s850
          %s852 = smul.addr %s32, 4
          %s853 = sadd.s32 %s33, %s852
          %s854 = smul.addr %s853, 128
          %s855 = scalar_lea.hbm %s3, %s854
          %s856 = sshll.u32 %s840, 4
          %s857 = int_to_ptr.vmem [resolvable:$true] %s856
          %862 = dma.vmem_to_hbm [thread:$0]  %s857, 256, %s855, %s837, 128, 256, 8
        $region48: #{tpu_custom_call.1} parent=31 // pred_fallthru
          _
        // Predicated region
        $region49: #{tpu_custom_call.1} parent=31 // pred_check
          %p863 = pneg %p172
        $region50: #{tpu_custom_call.1} parent=31 // pred_check_branch
          %865 = sbr.rel (%p863) target = $region52
        $region51: #{tpu_custom_call.1} parent=31 // pred_region
          %s867 = ssub.s32 256, 256
          %868 = vsyncadd %s842, %s867
          %s869 = smul.addr %s32, 4
          %s870 = sadd.s32 %s33, %s869
          %s871 = smul.addr %s870, 128
          %s872 = scalar_lea.hbm %s4, %s871
          %s873 = sshll.u32 %s845, 4
          %s874 = int_to_ptr.vmem [resolvable:$true] %s873
          %879 = dma.vmem_to_hbm [thread:$0]  %s874, 256, %s872, %s842, 128, 256, 8
        $region52: #{tpu_custom_call.1} parent=31 // pred_fallthru
          _
      $region32: #{tpu_custom_call.1} parent=5 // pred_fallthru
        _
      %p880 = scmp.le.s32.totalorder 2, %s23
      // Predicated region
      $region53: #{tpu_custom_call.1} parent=5 // pred_check
        %p881 = pneg %p880
      $region54: #{tpu_custom_call.1} parent=5 // pred_check_branch
        %883 = sbr.rel (%p881) target = $region56
      $region55: #{tpu_custom_call.1} parent=5 // pred_region
        %s884 = ssub.s32 %s23, 2
        // Predicated region
        $region57: #{tpu_custom_call.1} parent=55 // pred_check
          %p885 = pneg %p150
        $region58: #{tpu_custom_call.1} parent=55 // pred_check_branch
          %887 = sbr.rel (%p885) target = $region60
        $region59: #{tpu_custom_call.1} parent=55 // pred_region
          %s888 = sand.u32 %s135, 1
          %s889 = scalar_lea.sflag [#allocation4], %s888
          %s890 = sand.u32 %s135, 1
          %s891 = smul.addr %s890, 16
          %s892 = scalar_lea.vmem [#allocation8], %s891
          %893 = dma.done %s889, 256
        $region60: #{tpu_custom_call.1} parent=55 // pred_fallthru
          _
        // Predicated region
        $region61: #{tpu_custom_call.1} parent=55 // pred_check
          %p894 = pneg %p178
        $region62: #{tpu_custom_call.1} parent=55 // pred_check_branch
          %896 = sbr.rel (%p894) target = $region64
        $region63: #{tpu_custom_call.1} parent=55 // pred_region
          %s897 = sand.u32 %s163, 1
          %s898 = scalar_lea.sflag [#allocation10], %s897
          %s899 = sand.u32 %s163, 1
          %s900 = smul.addr %s899, 16
          %s901 = scalar_lea.vmem [#allocation9], %s900
          %902 = dma.done %s898, 256
        $region64: #{tpu_custom_call.1} parent=55 // pred_fallthru
          _
      $region56: #{tpu_custom_call.1} parent=5 // pred_fallthru
        _
    $region6: #{tpu_custom_call.1} parent=1 // loop_footer
      %s27 = sadd.s32 1, %s23
    $region7: #{tpu_custom_call.1} parent=1 // loop_footer_branch
      %22 = sbr.rel target = $region3
    $region8: #{tpu_custom_call.1} parent=1 // loop_exit
      _
    %903 = vsyncpa [#allocation3], 1
    %s904 = scalar_lea.sflag [#allocation3], 1
    %905 = vsyncpa %s904, 1
    %906 = vsyncpa [#allocation6], 1
    %s907 = scalar_lea.sflag [#allocation6], 1
    %908 = vsyncpa %s907, 1
    %909 = vsyncpa [#allocation4], 1
    %s910 = scalar_lea.sflag [#allocation4], 1
    %911 = vsyncpa %s910, 1
    %912 = vsyncpa [#allocation10], 1
    %s913 = scalar_lea.sflag [#allocation10], 1
    %914 = vsyncpa %s913, 1

</llo_original>
